<compile_context>
chip_gen: v7x
topology: tpu7x:2x2x1
jax: 0.10.0
libtpu: 0.0.40
codegen_flags: <defaults>
</compile_context>

<pallas_src>
import functools

import jax
import jax.numpy as jnp
from jax.experimental import pallas as pl
from jax.experimental.pallas import tpu as pltpu


def _channel_attention_kernel(x_ref, w1_ref, w2_ref, o_ref,
                              sum_acc, max_acc, *, hw, ts):
    """Grid = (N, num_spatial_tiles).

    x_ref   : (1, C, TS)  tile of x reshaped to [N, C, H*W]
    w1_ref  : (Ch, C)     fc1 weight (Conv2d C -> Ch, 1x1, no bias)
    w2_ref  : (C, Ch)     fc2 weight (Conv2d Ch -> C, 1x1, no bias)
    o_ref   : (1, C, 1)   sigmoid attention for this image
    sum_acc : (C, 1) f32  VMEM running sum   over H*W
    max_acc : (C, 1) f32  VMEM running max   over H*W
    """
    s = pl.program_id(1)
    ns = pl.num_programs(1)

    @pl.when(s == 0)
    def _init():
        sum_acc[...] = jnp.zeros_like(sum_acc)
        max_acc[...] = jnp.full_like(max_acc, -jnp.inf)

    x = x_ref[0].astype(jnp.float32)                 # (C, TS), spatial in lanes

    if hw % ts != 0:
        # Ragged last spatial tile: mask out-of-bounds lanes.
        col = jax.lax.broadcasted_iota(jnp.int32, x.shape, 1)
        valid = (s * ts + col) < hw
        x_s = jnp.where(valid, x, 0.0)
        x_m = jnp.where(valid, x, -jnp.inf)
    else:
        x_s = x
        x_m = x

    sum_acc[...] += jnp.sum(x_s, axis=-1, keepdims=True)                  # (C, 1)
    max_acc[...] = jnp.maximum(max_acc[...],
                               jnp.max(x_m, axis=-1, keepdims=True))      # (C, 1)

    @pl.when(s == ns - 1)
    def _finalize():
        w1 = w1_ref[...].astype(jnp.float32)         # (Ch, C)
        w2 = w2_ref[...].astype(jnp.float32)         # (C, Ch)
        avg = sum_acc[...] * jnp.float32(1.0 / hw)   # (C, 1)
        mx = max_acc[...]                            # (C, 1)

        def mlp(v):                                  # shared fc1 -> ReLU -> fc2
            h = jnp.maximum(jnp.dot(w1, v, preferred_element_type=jnp.float32), 0.0)
            return jnp.dot(w2, h, preferred_element_type=jnp.float32)

        y = jax.nn.sigmoid(mlp(avg) + mlp(mx))       # (C, 1)
        o_ref[...] = y[None].astype(o_ref.dtype)     # (1, C, 1)


def channel_attention(x, w_fc1, w_fc2):
    """x: [N, C, H, W]; w_fc1: [Ch, C, 1, 1]; w_fc2: [C, Ch, 1, 1].

    Returns the sigmoid channel-attention map [N, C, 1, 1] (same as the
    PyTorch module's forward output).
    """
    N, C, H, W = x.shape
    Ch = w_fc1.shape[0]
    HW = H * W

    # Free reshapes (contiguous) — no extra HBM passes.
    x_flat = x.reshape(N, C, HW)
    w1 = w_fc1.reshape(Ch, C)
    w2 = w_fc2.reshape(C, Ch)

    # Spatial tile: lane-dense (multiple of 128) or the full extent, sized so a
    # single (C, TS) tile stays ~4 MiB (comfortable double-buffering headroom
    # on v5e/v6e/v7x VMEM defaults).
    itemsize = jnp.dtype(x.dtype).itemsize
    max_block_bytes = 4 * 1024 * 1024
    ts_cap = max(128, (max_block_bytes // (C * itemsize)) // 128 * 128)
    ts = HW if HW <= ts_cap else ts_cap
    n_s = pl.cdiv(HW, ts)

    kernel = functools.partial(_channel_attention_kernel, hw=HW, ts=ts)

    out = pl.pallas_call(
        kernel,
        out_shape=jax.ShapeDtypeStruct((N, C, 1), x.dtype),
        grid_spec=pltpu.PrefetchScalarGridSpec(
            num_scalar_prefetch=0,
            grid=(N, n_s),
            in_specs=[
                pl.BlockSpec((1, C, ts), lambda n, s: (n, 0, s)),   # streamed x tiles
                pl.BlockSpec((Ch, C), lambda n, s: (0, 0)),          # VMEM-resident fc1
                pl.BlockSpec((C, Ch), lambda n, s: (0, 0)),          # VMEM-resident fc2
            ],
            out_specs=pl.BlockSpec((1, C, 1), lambda n, s: (n, 0, 0)),
            scratch_shapes=[
                pltpu.VMEM((C, 1), jnp.float32),   # running sum
                pltpu.VMEM((C, 1), jnp.float32),   # running max
            ],
        ),
        compiler_params=pltpu.CompilerParams(
            dimension_semantics=("parallel", "arbitrary"),
        ),
    )(x_flat, w1, w2)

    return out.reshape(N, C, 1, 1)


def _reference(x, w_fc1, w_fc2):
    """Pure-JAX reference of ChannelAttention.forward (eval semantics)."""
    N, C, H, W = x.shape
    Ch = w_fc1.shape[0]
    w1 = w_fc1.reshape(Ch, C)
    w2 = w_fc2.reshape(C, Ch)
    avg = jnp.mean(x, axis=(2, 3))   # (N, C)
    mx = jnp.max(x, axis=(2, 3))     # (N, C)

    def mlp(v):                      # (N, C) -> (N, C)
        h = jnp.maximum(v @ w1.T, 0.0)
        return h @ w2.T

    y = jax.nn.sigmoid(mlp(avg) + mlp(mx))
    return y[:, :, None, None]


if __name__ == "__main__":
    key = jax.random.PRNGKey(0)
    k_x, k_w1, k_w2 = jax.random.split(key, 3)

    # Module hard-codes in_planes // 16 (the `ratio` arg is ignored), so use
    # C >= 16 to get a nonzero hidden width.
    N, C, H, W = 2, 32, 16, 16
    Ch = C // 16

    x = jax.random.normal(k_x, (N, C, H, W), dtype=jnp.float32)
    w_fc1 = 0.3 * jax.random.normal(k_w1, (Ch, C, 1, 1), dtype=jnp.float32)
    w_fc2 = 0.3 * jax.random.normal(k_w2, (C, Ch, 1, 1), dtype=jnp.float32)

    out = channel_attention(x, w_fc1, w_fc2)
    out = jax.block_until_ready(out)

    ref = _reference(x, w_fc1, w_fc2)
    assert out.shape == (N, C, 1, 1), out.shape
    assert jnp.allclose(out, ref, rtol=1e-4, atol=1e-5), (
        "mismatch vs reference, max abs err = "
        + str(float(jnp.max(jnp.abs(out - ref)))))

    print("KERNEL_OK")
</pallas_src>

<mosaic_0001>
module attributes {stable_mosaic.version = 11 : i64} {
  func.func @_channel_attention_kernel(%arg0: i32, %arg1: i32, %arg2: memref<1x32x256xf32, #tpu.memory_space<vmem>>, %arg3: memref<2x32xf32, #tpu.memory_space<vmem>>, %arg4: memref<32x2xf32, #tpu.memory_space<vmem>>, %arg5: memref<1x32x1xf32, #tpu.memory_space<vmem>>, %arg6: memref<32x1xf32, #tpu.memory_space<vmem>>, %arg7: memref<32x1xf32, #tpu.memory_space<vmem>>) attributes {dimension_semantics = [#tpu.dimension_semantics<parallel>, #tpu.dimension_semantics<arbitrary>], iteration_bounds = array<i64: 2, 1>, scalar_prefetch = 0 : i64, scratch_operands = 2 : i64, tpu.core_type = #tpu.core_type<tc>, window_params = [{transform_indices = @transform_0, window_bounds = array<i64: 1, 32, 256>}, {pipeline_mode = #tpu.pipeline_mode<synchronous>, transform_indices = @transform_1, window_bounds = array<i64: 2, 32>}, {pipeline_mode = #tpu.pipeline_mode<synchronous>, transform_indices = @transform_2, window_bounds = array<i64: 32, 2>}, {transform_indices = @transform_3, window_bounds = array<i64: 1, 32, 1>}]} {
    %c0_i32 = arith.constant 0 : i32
    %0 = arith.cmpi eq, %arg1, %c0_i32 : i32
    %1 = arith.extui %0 : i1 to i32
    %c0_i32_0 = arith.constant 0 : i32
    %2 = arith.cmpi ne, %1, %c0_i32_0 : i32
    scf.if %2 {
      %cst_14 = arith.constant 0.000000e+00 : f32
      %18 = vector.broadcast %cst_14 : f32 to vector<32x1xf32>
      %c0_15 = arith.constant 0 : index
      %c0_16 = arith.constant 0 : index
      %19 = vector.load %arg6[%c0_15, %c0_16] : memref<32x1xf32, #tpu.memory_space<vmem>>, vector<32x1xf32>
      tpu.vector_store %arg6[%c0_15, %c0_16], %18 {strides = array<i32>} : memref<32x1xf32, #tpu.memory_space<vmem>>, vector<32x1xf32>,
      %cst_17 = arith.constant 0xFF800000 : f32
      %20 = vector.broadcast %cst_17 : f32 to vector<32x1xf32>
      %c0_18 = arith.constant 0 : index
      %c0_19 = arith.constant 0 : index
      %21 = vector.load %arg7[%c0_18, %c0_19] : memref<32x1xf32, #tpu.memory_space<vmem>>, vector<32x1xf32>
      tpu.vector_store %arg7[%c0_18, %c0_19], %20 {strides = array<i32>} : memref<32x1xf32, #tpu.memory_space<vmem>>, vector<32x1xf32>,
    } else {
    }
    %c0 = arith.constant 0 : index
    %c0_1 = arith.constant 0 : index
    %c0_2 = arith.constant 0 : index
    %3 = vector.load %arg2[%c0, %c0_1, %c0_2] : memref<1x32x256xf32, #tpu.memory_space<vmem>>, vector<1x32x256xf32>
    %4 = vector.shape_cast %3 : vector<1x32x256xf32> to vector<32x256xf32>
    %c0_3 = arith.constant 0 : index
    %c0_4 = arith.constant 0 : index
    %5 = vector.load %arg6[%c0_3, %c0_4] : memref<32x1xf32, #tpu.memory_space<vmem>>, vector<32x1xf32>
    %cst = arith.constant dense<0.000000e+00> : vector<32xf32>
    %6 = vector.multi_reduction <add>, %4, %cst [1] : vector<32x256xf32> to vector<32xf32>
    %7 = vector.shape_cast %6 : vector<32xf32> to vector<32x1xf32>
    %8 = arith.addf %5, %7 : vector<32x1xf32>
    %c0_5 = arith.constant 0 : index
    %c0_6 = arith.constant 0 : index
    %9 = vector.load %arg6[%c0_5, %c0_6] : memref<32x1xf32, #tpu.memory_space<vmem>>, vector<32x1xf32>
    tpu.vector_store %arg6[%c0_5, %c0_6], %8 {strides = array<i32>} : memref<32x1xf32, #tpu.memory_space<vmem>>, vector<32x1xf32>,
    %c0_7 = arith.constant 0 : index
    %c0_8 = arith.constant 0 : index
    %10 = vector.load %arg7[%c0_7, %c0_8] : memref<32x1xf32, #tpu.memory_space<vmem>>, vector<32x1xf32>
    %cst_9 = arith.constant dense<0xFF800000> : vector<32xf32>
    %11 = vector.multi_reduction <maximumf>, %4, %cst_9 [1] : vector<32x256xf32> to vector<32xf32>
    %12 = vector.shape_cast %11 : vector<32xf32> to vector<32x1xf32>
    %13 = arith.maximumf %10, %12 : vector<32x1xf32>
    %c0_10 = arith.constant 0 : index
    %c0_11 = arith.constant 0 : index
    %14 = vector.load %arg7[%c0_10, %c0_11] : memref<32x1xf32, #tpu.memory_space<vmem>>, vector<32x1xf32>
    tpu.vector_store %arg7[%c0_10, %c0_11], %13 {strides = array<i32>} : memref<32x1xf32, #tpu.memory_space<vmem>>, vector<32x1xf32>,
    %c0_i32_12 = arith.constant 0 : i32
    %15 = arith.cmpi eq, %arg1, %c0_i32_12 : i32
    %16 = arith.extui %15 : i1 to i32
    %c0_i32_13 = arith.constant 0 : i32
    %17 = arith.cmpi ne, %16, %c0_i32_13 : i32
    scf.if %17 {
      %c0_14 = arith.constant 0 : index
      %c0_15 = arith.constant 0 : index
      %18 = vector.load %arg3[%c0_14, %c0_15] : memref<2x32xf32, #tpu.memory_space<vmem>>, vector<2x32xf32>
      %c0_16 = arith.constant 0 : index
      %c0_17 = arith.constant 0 : index
      %19 = vector.load %arg4[%c0_16, %c0_17] : memref<32x2xf32, #tpu.memory_space<vmem>>, vector<32x2xf32>
      %c0_18 = arith.constant 0 : index
      %c0_19 = arith.constant 0 : index
      %20 = vector.load %arg6[%c0_18, %c0_19] : memref<32x1xf32, #tpu.memory_space<vmem>>, vector<32x1xf32>
      %cst_20 = arith.constant 3.906250e-03 : f32
      %21 = vector.broadcast %cst_20 : f32 to vector<32x1xf32>
      %22 = arith.mulf %20, %21 : vector<32x1xf32>
      %c0_21 = arith.constant 0 : index
      %c0_22 = arith.constant 0 : index
      %23 = vector.load %arg7[%c0_21, %c0_22] : memref<32x1xf32, #tpu.memory_space<vmem>>, vector<32x1xf32>
      %cst_23 = arith.constant dense<0.000000e+00> : vector<2x1xf32>
      %24 = tpu.matmul %18, %22, %cst_23 {dimension_numbers = #tpu.dot_dimension_numbers<[1], [0], [0], [1], [0, 0, 1, 1], [], []>} : vector<2x32xf32>, vector<32x1xf32>, vector<2x1xf32> -> vector<2x1xf32>
      %cst_24 = arith.constant 0.000000e+00 : f32
      %25 = vector.broadcast %cst_24 : f32 to vector<2x1xf32>
      %26 = arith.maximumf %24, %25 : vector<2x1xf32>
      %cst_25 = arith.constant dense<0.000000e+00> : vector<32x1xf32>
      %27 = tpu.matmul %19, %26, %cst_25 {dimension_numbers = #tpu.dot_dimension_numbers<[1], [0], [0], [1], [0, 0, 1, 1], [], []>} : vector<32x2xf32>, vector<2x1xf32>, vector<32x1xf32> -> vector<32x1xf32>
      %cst_26 = arith.constant dense<0.000000e+00> : vector<2x1xf32>
      %28 = tpu.matmul %18, %23, %cst_26 {dimension_numbers = #tpu.dot_dimension_numbers<[1], [0], [0], [1], [0, 0, 1, 1], [], []>} : vector<2x32xf32>, vector<32x1xf32>, vector<2x1xf32> -> vector<2x1xf32>
      %cst_27 = arith.constant 0.000000e+00 : f32
      %29 = vector.broadcast %cst_27 : f32 to vector<2x1xf32>
      %30 = arith.maximumf %28, %29 : vector<2x1xf32>
      %cst_28 = arith.constant dense<0.000000e+00> : vector<32x1xf32>
      %31 = tpu.matmul %19, %30, %cst_28 {dimension_numbers = #tpu.dot_dimension_numbers<[1], [0], [0], [1], [0, 0, 1, 1], [], []>} : vector<32x2xf32>, vector<2x1xf32>, vector<32x1xf32> -> vector<32x1xf32>
      %32 = arith.addf %27, %31 : vector<32x1xf32>
      %33 = arith.negf %32 : vector<32x1xf32>
      %34 = math.exp %33 : vector<32x1xf32>
      %cst_29 = arith.constant 1.000000e+00 : f32
      %35 = vector.broadcast %cst_29 : f32 to vector<32x1xf32>
      %36 = arith.addf %35, %34 : vector<32x1xf32>
      %37 = arith.divf %35, %36 : vector<32x1xf32>
      %38 = vector.shape_cast %37 : vector<32x1xf32> to vector<1x32x1xf32>
      %c0_30 = arith.constant 0 : index
      %c0_31 = arith.constant 0 : index
      %c0_32 = arith.constant 0 : index
      %39 = vector.load %arg5[%c0_30, %c0_31, %c0_32] : memref<1x32x1xf32, #tpu.memory_space<vmem>>, vector<1x32x1xf32>
      tpu.vector_store %arg5[%c0_30, %c0_31, %c0_32], %38 {strides = array<i32>} : memref<1x32x1xf32, #tpu.memory_space<vmem>>, vector<1x32x1xf32>,
    } else {
    }
    return
  }
  func.func @transform_0(%arg0: i32, %arg1: i32) -> (i32, i32, i32) {
    %c0_i32 = arith.constant 0 : i32
    %c0_i32_0 = arith.constant 0 : i32
    return %arg0, %c0_i32, %arg1 : i32, i32, i32
  }
  func.func @transform_1(%arg0: i32, %arg1: i32) -> (i32, i32) {
    %c0_i32 = arith.constant 0 : i32
    %c0_i32_0 = arith.constant 0 : i32
    %c0_i32_1 = arith.constant 0 : i32
    return %c0_i32, %c0_i32_0 : i32, i32
  }
  func.func @transform_2(%arg0: i32, %arg1: i32) -> (i32, i32) {
    %c0_i32 = arith.constant 0 : i32
    %c0_i32_0 = arith.constant 0 : i32
    %c0_i32_1 = arith.constant 0 : i32
    return %c0_i32, %c0_i32_0 : i32, i32
  }
  func.func @transform_3(%arg0: i32, %arg1: i32) -> (i32, i32, i32) {
    %c0_i32 = arith.constant 0 : i32
    %c0_i32_0 = arith.constant 0 : i32
    %c0_i32_1 = arith.constant 0 : i32
    return %arg0, %c0_i32, %c0_i32_0 : i32, i32, i32
  }
}

</mosaic_0001>

<llo_original>
// kernel: tpu_custom_call.1
$region0: #{tpu_custom_call.1}
  #allocation0 [shape = 'u32[]', space=smem, size = 0x4, offset = 0x4, fixed_abs, tag = 'smem constant byte address 0x4 - core index']
  #allocation1 [shape = 'u32[144,128]{1,0:T(1,128)}', space=vmem, size = 0x12000, scoped, tag = 'internal scratch']
  #allocation2 [shape = 'f32[32,1]{1,0:T(8,128)}', space=vmem, size = 0x4000, scoped, tag = 'scratch operand']
  #allocation3 [shape = 'f32[32,1]{1,0:T(8,128)}', space=vmem, size = 0x4000, scoped, tag = 'scratch operand']
  %s0 = inlined_call_operand.hbm [shape: f32[2,32,256], index: 0, kind: input, shape index: {}]
  %s1 = inlined_call_operand.vmem [shape: f32[2,32], index: 1, kind: input, shape index: {}]
  %s2 = inlined_call_operand.vmem [shape: f32[32,2], index: 2, kind: input, shape index: {}]
  %s3 = inlined_call_operand.vmem [shape: f32[2,32,1], index: 3, kind: output, shape index: {}]
  %s4 = sld [smem:[#allocation0]]
  $region57: #{tpu_custom_call.1} parent=0
    _
  %s6 = ssub.s32 1, %s4
  %s7 = scalar_select 0, %s6, %s4
  $region1: #{tpu_custom_call.1} parent=0
    #allocation4 [shape = 'u8[65536]{0}', space=vmem, size = 0x10000, scoped, tag = 'input window, operand 0']
    #allocation5 [shape = 's32[2]{0}', space=sflag, size = 0x8, scoped, tag = 'scoped memory for tpu_custom_call.1']
    %8 = vsyncpa [#allocation5], 0
    %s9 = scalar_lea.sflag [#allocation5], 1
    %10 = vsyncpa %s9, 0
    loop: start=0, step=1, limit=4
    $region2: #{tpu_custom_call.1} parent=1 // loop_pre_header
      _
    $region3: #{tpu_custom_call.1} parent=1 // loop_header
      %s12 = sphi 0, %s16
      %p13 = scmp.ge.s32.totalorder %s12, 4
      %s19 = sphi 0, %s31
      %s20 = sphi 0, %s27
      %s21 = sphi 0, %s19
      %s22 = sphi 0, %s20
      %s23 = sphi 0, %s21
      %s24 = sphi 0, %s22
      %s36 = sphi 0, %s38
      %s39 = sphi 0, %s36
      %s40 = sphi 0, %s39
      %s56 = sphi 0, %s40
      %s60 = sphi 0, %s60
      %s62 = sphi 0, %s60
      %s63 = sphi 0, %s62
      %s77 = sphi 0, %s63
      %s81 = sphi 0, %s81
      %s83 = sphi 0, %s81
      %s84 = sphi 0, %s83
      %s98 = sphi 0, %s84
      %s104 = sphi 0, %s106
      %s107 = sphi 0, %s104
      %s108 = sphi 0, %s107
      %s124 = sphi 0, %s108
    $region4: #{tpu_custom_call.1} parent=1 // loop_header_branch
      %15 = sbr.rel (%p13) target = $region8
    $region5: #{tpu_custom_call.1} parent=1 // loop_body
      %s17 = ssub.s32 %s12, 1
      %s18 = ssub.s32 %s12, 2
      %s25 = sadd.s32 1, %s20
      %p26 = scmp.ge.s32.totalorder %s25, 1
      %s27 = scalar_select %p26, 0, %s25
      %s28 = sadd.s32 1, %s19
      %s29 = scalar_select %p26, %s28, %s19
      %p30 = scmp.ge.s32.totalorder %s29, 2
      %s31 = scalar_select %p30, 0, %s29
      %s32 = ssub.s32 %s19, %s31
      %s33 = ssub.s32 %s20, %s27
      %s34 = sor.u32 %s32, %s33
      %p35 = scmp.eq.s32.totalorder %s34, 0
      %s37 = sadd.s32 %s36, 1
      %s38 = scalar_select %p35, %s36, %s37
      %p41 = pneg %p35
      %p42 = scmp.eq.s32.totalorder %s12, 1
      %p43 = por %p41, %p42
      %p44 = scmp.ne.s32.totalorder %s36, %s39
      %p45 = scmp.eq.s32.totalorder %s12, 0
      %p46 = por %p44, %p45
      %p47 = scmp.ne.s32.totalorder %s36, %s39
      %p48 = scmp.eq.s32.totalorder %s17, 1
      %p49 = por %p47, %p48
      %p50 = scmp.ne.s32.totalorder %s39, %s40
      %p51 = scmp.eq.s32.totalorder %s17, 0
      %p52 = por %p50, %p51
      %p53 = scmp.ne.s32.totalorder %s39, %s40
      %p54 = scmp.eq.s32.totalorder %s18, 1
      %p55 = por %p53, %p54
      %p57 = scmp.ne.s32.totalorder %s40, %s56
      %p58 = scmp.eq.s32.totalorder %s18, 0
      %p59 = por %p57, %p58
      %s61 = sadd.s32 %s60, 1
      %p64 = scmp.eq.s32.totalorder %s12, 1
      %p65 = scmp.ne.s32.totalorder %s60, %s62
      %p66 = scmp.eq.s32.totalorder %s12, 0
      %p67 = por %p65, %p66
      %p68 = scmp.ne.s32.totalorder %s60, %s62
      %p69 = scmp.eq.s32.totalorder %s17, 1
      %p70 = por %p68, %p69
      %p71 = scmp.ne.s32.totalorder %s62, %s63
      %p72 = scmp.eq.s32.totalorder %s17, 0
      %p73 = por %p71, %p72
      %p74 = scmp.ne.s32.totalorder %s62, %s63
      %p75 = scmp.eq.s32.totalorder %s18, 1
      %p76 = por %p74, %p75
      %p78 = scmp.ne.s32.totalorder %s63, %s77
      %p79 = scmp.eq.s32.totalorder %s18, 0
      %p80 = por %p78, %p79
      %s82 = sadd.s32 %s81, 1
      %p85 = scmp.eq.s32.totalorder %s12, 1
      %p86 = scmp.ne.s32.totalorder %s81, %s83
      %p87 = scmp.eq.s32.totalorder %s12, 0
      %p88 = por %p86, %p87
      %p89 = scmp.ne.s32.totalorder %s81, %s83
      %p90 = scmp.eq.s32.totalorder %s17, 1
      %p91 = por %p89, %p90
      %p92 = scmp.ne.s32.totalorder %s83, %s84
      %p93 = scmp.eq.s32.totalorder %s17, 0
      %p94 = por %p92, %p93
      %p95 = scmp.ne.s32.totalorder %s83, %s84
      %p96 = scmp.eq.s32.totalorder %s18, 1
      %p97 = por %p95, %p96
      %p99 = scmp.ne.s32.totalorder %s84, %s98
      %p100 = scmp.eq.s32.totalorder %s18, 0
      %p101 = por %p99, %p100
      %s102 = ssub.s32 %s19, %s31
      %p103 = scmp.eq.s32.totalorder %s102, 0
      %s105 = sadd.s32 %s104, 1
      %s106 = scalar_select %p103, %s104, %s105
      %p109 = pneg %p103
      %p110 = scmp.eq.s32.totalorder %s12, 1
      %p111 = por %p109, %p110
      %p112 = scmp.ne.s32.totalorder %s104, %s107
      %p113 = scmp.eq.s32.totalorder %s12, 0
      %p114 = por %p112, %p113
      %p115 = scmp.ne.s32.totalorder %s104, %s107
      %p116 = scmp.eq.s32.totalorder %s17, 1
      %p117 = por %p115, %p116
      %p118 = scmp.ne.s32.totalorder %s107, %s108
      %p119 = scmp.eq.s32.totalorder %s17, 0
      %p120 = por %p118, %p119
      %p121 = scmp.ne.s32.totalorder %s107, %s108
      %p122 = scmp.eq.s32.totalorder %s18, 1
      %p123 = por %p121, %p122
      %p125 = scmp.ne.s32.totalorder %s108, %s124
      %p126 = scmp.eq.s32.totalorder %s18, 0
      %p127 = por %p125, %p126
      %p128 = scmp.le.s32.totalorder 1, %s12
      %p129 = scmp.lt.s32.totalorder %s12, 3
      %p130 = pnand %p128, %p129
      %p131 = pneg %p130
      // Predicated region
      $region9: #{tpu_custom_call.1} parent=5 // pred_check
        _
      $region10: #{tpu_custom_call.1} parent=5 // pred_check_branch
        %133 = sbr.rel (%p130) target = $region12
      $region11: #{tpu_custom_call.1} parent=5 // pred_region
        %s134 = ssub.s32 %s12, 1
        // Predicated region
        $region13: #{tpu_custom_call.1} parent=11 // pred_check
          %p135 = pneg %p73
        $region14: #{tpu_custom_call.1} parent=11 // pred_check_branch
          %137 = sbr.rel (%p135) target = $region16
        $region15: #{tpu_custom_call.1} parent=11 // pred_region
          _
        $region16: #{tpu_custom_call.1} parent=11 // pred_fallthru
          _
        // Predicated region
        $region17: #{tpu_custom_call.1} parent=11 // pred_check
          %p138 = pneg %p94
        $region18: #{tpu_custom_call.1} parent=11 // pred_check_branch
          %140 = sbr.rel (%p138) target = $region20
        $region19: #{tpu_custom_call.1} parent=11 // pred_region
          _
        $region20: #{tpu_custom_call.1} parent=11 // pred_fallthru
          _
      $region12: #{tpu_custom_call.1} parent=5 // pred_fallthru
        _
      %p141 = scmp.lt.s32.totalorder %s12, 2
      // Predicated region
      $region21: #{tpu_custom_call.1} parent=5 // pred_check
        %p142 = pneg %p141
      $region22: #{tpu_custom_call.1} parent=5 // pred_check_branch
        %144 = sbr.rel (%p142) target = $region24
      $region23: #{tpu_custom_call.1} parent=5 // pred_region
        // Predicated region
        $region25: #{tpu_custom_call.1} parent=23 // pred_check
          %p145 = pneg %p46
        $region26: #{tpu_custom_call.1} parent=23 // pred_check_branch
          %147 = sbr.rel (%p145) target = $region28
        $region27: #{tpu_custom_call.1} parent=23 // pred_region
          %s148 = sand.u32 %s36, 1
          %s149 = scalar_lea.sflag [#allocation5], %s148
          %s150 = sand.u32 %s36, 1
          %s151 = smul.addr %s150, 64
          %s152 = scalar_lea.vmem [#allocation4], %s151
          %s153 = smul.u32 2, %s20
          %s155 = ssub.s32 1024, 1024
          %156 = vsyncadd %s149, %s155
          %s157 = smul.addr %s19, 8
          %s158 = sadd.s32 %s153, %s157
          %s159 = smul.addr %s158, 128
          %s160 = scalar_lea.hbm %s0, %s159
          %s161 = sshll.u32 %s152, 4
          %s162 = int_to_ptr.vmem [resolvable:$true] %s161
          %167 = dma.hbm_to_vmem [thread:$0]  %s160, 1024, %s162, %s149, 256, 256, 16
        $region28: #{tpu_custom_call.1} parent=23 // pred_fallthru
          _
      $region24: #{tpu_custom_call.1} parent=5 // pred_fallthru
        _
      %p168 = scmp.le.s32.totalorder 1, %s12
      %p169 = scmp.lt.s32.totalorder %s12, 3
      %p170 = pnand %p168, %p169
      %p171 = pneg %p170
      // Predicated region
      $region29: #{tpu_custom_call.1} parent=5 // pred_check
        _
      $region30: #{tpu_custom_call.1} parent=5 // pred_check_branch
        %173 = sbr.rel (%p170) target = $region32
      $region31: #{tpu_custom_call.1} parent=5 // pred_region
        %s174 = ssub.s32 %s12, 1
        %s175 = sand.u32 %s39, 1
        %s176 = scalar_lea.sflag [#allocation5], %s175
        %s177 = sand.u32 %s39, 1
        %s178 = smul.addr %s177, 64
        %s179 = scalar_lea.vmem [#allocation4], %s178
        // Predicated region
        $region33: #{tpu_custom_call.1} parent=31 // pred_check
          %p180 = pneg %p52
        $region34: #{tpu_custom_call.1} parent=31 // pred_check_branch
          %182 = sbr.rel (%p180) target = $region36
        $region35: #{tpu_custom_call.1} parent=31 // pred_region
          %183 = dma.done %s176, 1024
        $region36: #{tpu_custom_call.1} parent=31 // pred_fallthru
          _
        %s184 = sand.u32 %s39, 1
        %s185 = scalar_lea.sflag [#allocation5], %s184
        %s186 = sand.u32 %s39, 1
        %s187 = smul.addr %s186, 64
        %s188 = scalar_lea.vmem [#allocation4], %s187
        %p189 = pneg %p52
        %p190 = pneg %p49
        %p191 = pneg %p73
        %p192 = pneg %p70
        %p193 = pneg %p94
        %p194 = pneg %p91
        %p195 = pneg %p120
        %p196 = pneg %p117
        %p197 = scmp.lt.s32.totalorder %s21, 1
        %s198 = scalar_select %p197, %s21, 1
        %s199 = smul.addr %s198, 4
        %s200 = smul.addr %s199, 8
        %s201 = scalar_lea.vmem %s3, %s200
        %s202 = smul.u32 2, %s22
        %p203 = scmp.lt.s32.totalorder %s21, 1
        %s204 = scalar_select %p203, %s21, 1
        %s205 = smul.addr %s204, 4
        %s206 = smul.addr %s205, 8
        %s207 = scalar_lea.vmem %s3, %s206
        %p208 = scmp.eq.s32.totalorder %s22, 0
        // Predicated region
        $region37: #{tpu_custom_call.1} parent=31 // pred_check
          %p209 = pneg %p208
        $region38: #{tpu_custom_call.1} parent=31 // pred_check_branch
          %211 = sbr.rel (%p209) target = $region40
        $region39: #{tpu_custom_call.1} parent=31 // pred_region
          %vm212 = vcmask 7168
          %213 = vst.msk [vmem:[#allocation2] sm:$0xff] %vm212, 0.0
          %214 = vst.msk [vmem:[#allocation2 + $0x8] sm:$0xff] %vm212, 0.0
          %215 = vst.msk [vmem:[#allocation2 + $0x10] sm:$0xff] %vm212, 0.0
          %216 = vst.msk [vmem:[#allocation2 + $0x18] sm:$0xff] %vm212, 0.0
          %217 = vst.msk [vmem:[#allocation3] sm:$0xff] %vm212, -inf
          %218 = vst.msk [vmem:[#allocation3 + $0x8] sm:$0xff] %vm212, -inf
          %219 = vst.msk [vmem:[#allocation3 + $0x10] sm:$0xff] %vm212, -inf
          %220 = vst.msk [vmem:[#allocation3 + $0x18] sm:$0xff] %vm212, -inf
        $region40: #{tpu_custom_call.1} parent=31 // pred_fallthru
          _
        %v221 = vld [vmem:[%s179] sm:$0xff]
        %v222 = vld [vmem:[%s179 + $0x8] sm:$0xff]
        %v223 = vld [vmem:[%s179 + $0x10] sm:$0xff]
        %v224 = vld [vmem:[%s179 + $0x18] sm:$0xff]
        %v225 = vld [vmem:[%s179 + $0x20] sm:$0xff]
        %v226 = vld [vmem:[%s179 + $0x28] sm:$0xff]
        %v227 = vld [vmem:[%s179 + $0x30] sm:$0xff]
        %v228 = vld [vmem:[%s179 + $0x38] sm:$0xff]
        %v229 = vld [vmem:[#allocation2] sm:$0xff]
        %v230 = vld [vmem:[#allocation2 + $0x8] sm:$0xff]
        %v231 = vld [vmem:[#allocation2 + $0x10] sm:$0xff]
        %v232 = vld [vmem:[#allocation2 + $0x18] sm:$0xff]
        %v233 = vadd.f32 %v221, %v222
        %234 = vadd.xlane.f32.xlu0 %v233
        %v235 = vpop.xlane.xlu0 %234
        %v236 = vadd.f32 %v223, %v224
        %237 = vadd.xlane.f32.xlu0 %v236
        %v238 = vpop.xlane.xlu0 %237
        %v239 = vadd.f32 %v225, %v226
        %240 = vadd.xlane.f32.xlu0 %v239
        %v241 = vpop.xlane.xlu0 %240
        %v242 = vadd.f32 %v227, %v228
        %243 = vadd.xlane.f32.xlu0 %v242
        %v244 = vpop.xlane.xlu0 %243
        %v245 = vadd.f32 %v229, %v235
        %v246 = vadd.f32 %v230, %v238
        %v247 = vadd.f32 %v231, %v241
        %v248 = vadd.f32 %v232, %v244
        %vm249 = vcmask 7168
        %250 = vst.msk [vmem:[#allocation2] sm:$0xff] %vm249, %v245
        %251 = vst.msk [vmem:[#allocation2 + $0x8] sm:$0xff] %vm249, %v246
        %252 = vst.msk [vmem:[#allocation2 + $0x10] sm:$0xff] %vm249, %v247
        %253 = vst.msk [vmem:[#allocation2 + $0x18] sm:$0xff] %vm249, %v248
        %v254 = vld [vmem:[#allocation3] sm:$0xff]
        %v255 = vld [vmem:[#allocation3 + $0x8] sm:$0xff]
        %v256 = vld [vmem:[#allocation3 + $0x10] sm:$0xff]
        %v257 = vld [vmem:[#allocation3 + $0x18] sm:$0xff]
        %v258 = vmax.f32 %v221, %v222
        %259 = vmax.xlane.f32.xlu0 %v258
        %v260 = vpop.xlane.xlu0 %259
        %v261 = vmax.f32 %v223, %v224
        %262 = vmax.xlane.f32.xlu0 %v261
        %v263 = vpop.xlane.xlu0 %262
        %v264 = vmax.f32 %v225, %v226
        %265 = vmax.xlane.f32.xlu0 %v264
        %v266 = vpop.xlane.xlu0 %265
        %v267 = vmax.f32 %v227, %v228
        %268 = vmax.xlane.f32.xlu0 %v267
        %v269 = vpop.xlane.xlu0 %268
        %v270 = vmax.f32 %v254, %v260
        %v271 = vmax.f32 %v255, %v263
        %v272 = vmax.f32 %v256, %v266
        %v273 = vmax.f32 %v257, %v269
        %274 = vst.msk [vmem:[#allocation3] sm:$0xff] %vm249, %v270
        %275 = vst.msk [vmem:[#allocation3 + $0x8] sm:$0xff] %vm249, %v271
        %276 = vst.msk [vmem:[#allocation3 + $0x10] sm:$0xff] %vm249, %v272
        %277 = vst.msk [vmem:[#allocation3 + $0x18] sm:$0xff] %vm249, %v273
        // Predicated region
        $region41: #{tpu_custom_call.1} parent=31 // pred_check
          %p278 = pneg %p208
        $region42: #{tpu_custom_call.1} parent=31 // pred_check_branch
          %280 = sbr.rel (%p278) target = $region44
        $region43: #{tpu_custom_call.1} parent=31 // pred_region
          %v281 = vld [vmem:[%s1] sm:$0x3]
          %v282 = vld [vmem:[%s2] sm:$0xff]
          %v283 = vld [vmem:[%s2 + $0x8] sm:$0xff]
          %v284 = vld [vmem:[%s2 + $0x10] sm:$0xff]
          %v285 = vld [vmem:[%s2 + $0x18] sm:$0xff]
          %v286 = vld [vmem:[#allocation2] sm:$0xff]
          %v287 = vld [vmem:[#allocation2 + $0x8] sm:$0xff]
          %v288 = vld [vmem:[#allocation2 + $0x10] sm:$0xff]
          %v289 = vld [vmem:[#allocation2 + $0x18] sm:$0xff]
          %v290 = vmul.f32 %v286, 0.00390625
          %v291 = vmul.f32 %v287, 0.00390625
          %v292 = vmul.f32 %v288, 0.00390625
          %v293 = vmul.f32 %v289, 0.00390625
          %v294 = vld [vmem:[#allocation3] sm:$0xff]
          %v295 = vld [vmem:[#allocation3 + $0x8] sm:$0xff]
          %v296 = vld [vmem:[#allocation3 + $0x10] sm:$0xff]
          %v297 = vld [vmem:[#allocation3 + $0x18] sm:$0xff]
          %vm298 = vcmask 261120
          %v300 = vsel %vm298, %v281, 0
          %302 = vmatprep.subr.mxu0 0.0
          %303 = vmatpush1.msra.mxu0 %v290
          %304 = vmatprep.subr.mxu0 0.0
          %305 = vmatpush1.msra.mxu0 %v291
          %306 = vmatprep.subr.mxu0 0.0
          %307 = vmatpush1.msra.mxu0 %v292
          %308 = vmatprep.subr.mxu0 0.0
          %309 = vmatpush1.msra.mxu0 %v293
          %310 = vmatprep.subr.mxu0 0.0
          %311 = vmatpush1.msra.mxu0 0.0
          %312 = vmatprep.subr.mxu0 0.0
          %313 = vmatpush1.msra.mxu0 0.0
          %314 = vmatprep.subr.mxu0 0.0
          %315 = vmatpush1.msra.mxu0 0.0
          %316 = vmatprep.subr.mxu0 0.0
          %317 = vmatpush1.msra.mxu0 0.0
          %318 = vmatprep.subr.mxu0 0.0
          %319 = vmatpush1.msra.mxu0 0.0
          %320 = vmatprep.subr.mxu0 0.0
          %321 = vmatpush1.msra.mxu0 0.0
          %322 = vmatprep.subr.mxu0 0.0
          %323 = vmatpush1.msra.mxu0 0.0
          %324 = vmatprep.subr.mxu0 0.0
          %325 = vmatpush1.msra.mxu0 0.0
          %326 = vmatprep.subr.mxu0 0.0
          %327 = vmatpush1.msra.mxu0 0.0
          %328 = vmatprep.subr.mxu0 0.0
          %329 = vmatpush1.msra.mxu0 0.0
          %330 = vmatprep.subr.mxu0 0.0
          %331 = vmatpush1.msra.mxu0 0.0
          %332 = vmatprep.subr.mxu0 0.0
          %333 = vmatpush1.msra.mxu0 0.0
          %334 = vmatprep.subr.mxu0 0.0
          %335 = vmatpush1.msra.mxu0 0.0
          %336 = vmatprep.subr.mxu0 0.0
          %337 = vmatpush1.msra.mxu0 0.0
          %338 = vmatprep.subr.mxu0 0.0
          %339 = vmatpush1.msra.mxu0 0.0
          %340 = vmatprep.subr.mxu0 0.0
          %341 = vmatpush1.msra.mxu0 0.0
          %342 = vmatprep.subr.mxu0 0.0
          %343 = vmatpush1.msra.mxu0 0.0
          %344 = vmatprep.subr.mxu0 0.0
          %345 = vmatpush1.msra.mxu0 0.0
          %346 = vmatprep.subr.mxu0 0.0
          %347 = vmatpush1.msra.mxu0 0.0
          %348 = vmatprep.subr.mxu0 0.0
          %349 = vmatpush1.msra.mxu0 0.0
          %350 = vmatprep.subr.mxu0 0.0
          %351 = vmatpush1.msra.mxu0 0.0
          %352 = vmatprep.subr.mxu0 0.0
          %353 = vmatpush1.msra.mxu0 0.0
          %354 = vmatprep.subr.mxu0 0.0
          %355 = vmatpush1.msra.mxu0 0.0
          %356 = vmatprep.subr.mxu0 0.0
          %357 = vmatpush1.msra.mxu0 0.0
          %358 = vmatprep.subr.mxu0 0.0
          %359 = vmatpush1.msra.mxu0 0.0
          %360 = vmatprep.subr.mxu0 0.0
          %361 = vmatpush1.msra.mxu0 0.0
          %362 = vmatprep.subr.mxu0 0.0
          %363 = vmatpush1.msra.mxu0 0.0
          %364 = vmatprep.subr.mxu0 0.0
          %365 = vmatpush1.msra.mxu0 0.0
          %366 = vmatprep.mubr.f32.mxu0 0.0
          %367 = vmatmul.mubr.f32.gmra.mrb[0].mxu0 %v300
          %v368 = vpop.f32.mrb[0].mxu0
          %v369 = vadd.f32 0.0, %v368
          %v370 = vpop.f32.mrb[0].mxu0
          %371 = vdwg.mxu0
          %v372 = vmax.f32 %v369, 0.0
          %373 = vmatprep.subr.mxu0 0.0
          %374 = vmatpush1.msra.mxu0 %v294
          %375 = vmatprep.subr.mxu0 0.0
          %376 = vmatpush1.msra.mxu0 %v295
          %377 = vmatprep.subr.mxu0 0.0
          %378 = vmatpush1.msra.mxu0 %v296
          %379 = vmatprep.subr.mxu0 0.0
          %380 = vmatpush1.msra.mxu0 %v297
          %381 = vmatprep.subr.mxu0 0.0
          %382 = vmatpush1.msra.mxu0 0.0
          %383 = vmatprep.subr.mxu0 0.0
          %384 = vmatpush1.msra.mxu0 0.0
          %385 = vmatprep.subr.mxu0 0.0
          %386 = vmatpush1.msra.mxu0 0.0
          %387 = vmatprep.subr.mxu0 0.0
          %388 = vmatpush1.msra.mxu0 0.0
          %389 = vmatprep.subr.mxu0 0.0
          %390 = vmatpush1.msra.mxu0 0.0
          %391 = vmatprep.subr.mxu0 0.0
          %392 = vmatpush1.msra.mxu0 0.0
          %393 = vmatprep.subr.mxu0 0.0
          %394 = vmatpush1.msra.mxu0 0.0
          %395 = vmatprep.subr.mxu0 0.0
          %396 = vmatpush1.msra.mxu0 0.0
          %397 = vmatprep.subr.mxu0 0.0
          %398 = vmatpush1.msra.mxu0 0.0
          %399 = vmatprep.subr.mxu0 0.0
          %400 = vmatpush1.msra.mxu0 0.0
          %401 = vmatprep.subr.mxu0 0.0
          %402 = vmatpush1.msra.mxu0 0.0
          %403 = vmatprep.subr.mxu0 0.0
          %404 = vmatpush1.msra.mxu0 0.0
          %405 = vmatprep.subr.mxu0 0.0
          %406 = vmatpush1.msra.mxu0 0.0
          %407 = vmatprep.subr.mxu0 0.0
          %408 = vmatpush1.msra.mxu0 0.0
          %409 = vmatprep.subr.mxu0 0.0
          %410 = vmatpush1.msra.mxu0 0.0
          %411 = vmatprep.subr.mxu0 0.0
          %412 = vmatpush1.msra.mxu0 0.0
          %413 = vmatprep.subr.mxu0 0.0
          %414 = vmatpush1.msra.mxu0 0.0
          %415 = vmatprep.subr.mxu0 0.0
          %416 = vmatpush1.msra.mxu0 0.0
          %417 = vmatprep.subr.mxu0 0.0
          %418 = vmatpush1.msra.mxu0 0.0
          %419 = vmatprep.subr.mxu0 0.0
          %420 = vmatpush1.msra.mxu0 0.0
          %421 = vmatprep.subr.mxu0 0.0
          %422 = vmatpush1.msra.mxu0 0.0
          %423 = vmatprep.subr.mxu0 0.0
          %424 = vmatpush1.msra.mxu0 0.0
          %425 = vmatprep.subr.mxu0 0.0
          %426 = vmatpush1.msra.mxu0 0.0
          %427 = vmatprep.subr.mxu0 0.0
          %428 = vmatpush1.msra.mxu0 0.0
          %429 = vmatprep.subr.mxu0 0.0
          %430 = vmatpush1.msra.mxu0 0.0
          %431 = vmatprep.subr.mxu0 0.0
          %432 = vmatpush1.msra.mxu0 0.0
          %433 = vmatprep.subr.mxu0 0.0
          %434 = vmatpush1.msra.mxu0 0.0
          %435 = vmatprep.subr.mxu0 0.0
          %436 = vmatpush1.msra.mxu0 0.0
          %437 = vmatprep.mubr.f32.mxu0 0.0
          %438 = vmatmul.mubr.f32.gmra.mrb[0].mxu0 %v300
          %v439 = vpop.f32.mrb[0].mxu0
          %v440 = vadd.f32 0.0, %v439
          %v441 = vpop.f32.mrb[0].mxu0
          %442 = vdwg.mxu0
          %v443 = vmax.f32 %v440, 0.0
          %vm444 = vcmask 15360
          %v446 = vsel %vm444, %v282, 0
          %v449 = vsel %vm444, %v283, 0
          %v452 = vsel %vm444, %v284, 0
          %v455 = vsel %vm444, %v285, 0
          %vm457 = vcmask 1041408
          %v459 = vsel %vm457, %v443, 0
          %461 = vmatprep.subr.mxu0 0.0
          %462 = vmatpush1.msra.mxu0 %v459
          %463 = vmatprep.subr.mxu0 0.0
          %464 = vmatpush1.msra.mxu0 0.0
          %465 = vmatprep.subr.mxu0 0.0
          %466 = vmatpush1.msra.mxu0 0.0
          %467 = vmatprep.subr.mxu0 0.0
          %468 = vmatpush1.msra.mxu0 0.0
          %469 = vmatprep.subr.mxu0 0.0
          %470 = vmatpush1.msra.mxu0 0.0
          %471 = vmatprep.subr.mxu0 0.0
          %472 = vmatpush1.msra.mxu0 0.0
          %473 = vmatprep.subr.mxu0 0.0
          %474 = vmatpush1.msra.mxu0 0.0
          %475 = vmatprep.subr.mxu0 0.0
          %476 = vmatpush1.msra.mxu0 0.0
          %477 = vmatprep.subr.mxu0 0.0
          %478 = vmatpush1.msra.mxu0 0.0
          %479 = vmatprep.subr.mxu0 0.0
          %480 = vmatpush1.msra.mxu0 0.0
          %481 = vmatprep.subr.mxu0 0.0
          %482 = vmatpush1.msra.mxu0 0.0
          %483 = vmatprep.subr.mxu0 0.0
          %484 = vmatpush1.msra.mxu0 0.0
          %485 = vmatprep.subr.mxu0 0.0
          %486 = vmatpush1.msra.mxu0 0.0
          %487 = vmatprep.subr.mxu0 0.0
          %488 = vmatpush1.msra.mxu0 0.0
          %489 = vmatprep.subr.mxu0 0.0
          %490 = vmatpush1.msra.mxu0 0.0
          %491 = vmatprep.subr.mxu0 0.0
          %492 = vmatpush1.msra.mxu0 0.0
          %493 = vmatprep.subr.mxu0 0.0
          %494 = vmatpush1.msra.mxu0 0.0
          %495 = vmatprep.subr.mxu0 0.0
          %496 = vmatpush1.msra.mxu0 0.0
          %497 = vmatprep.subr.mxu0 0.0
          %498 = vmatpush1.msra.mxu0 0.0
          %499 = vmatprep.subr.mxu0 0.0
          %500 = vmatpush1.msra.mxu0 0.0
          %501 = vmatprep.subr.mxu0 0.0
          %502 = vmatpush1.msra.mxu0 0.0
          %503 = vmatprep.subr.mxu0 0.0
          %504 = vmatpush1.msra.mxu0 0.0
          %505 = vmatprep.subr.mxu0 0.0
          %506 = vmatpush1.msra.mxu0 0.0
          %507 = vmatprep.subr.mxu0 0.0
          %508 = vmatpush1.msra.mxu0 0.0
          %509 = vmatprep.subr.mxu0 0.0
          %510 = vmatpush1.msra.mxu0 0.0
          %511 = vmatprep.subr.mxu0 0.0
          %512 = vmatpush1.msra.mxu0 0.0
          %513 = vmatprep.subr.mxu0 0.0
          %514 = vmatpush1.msra.mxu0 0.0
          %515 = vmatprep.subr.mxu0 0.0
          %516 = vmatpush1.msra.mxu0 0.0
          %517 = vmatprep.subr.mxu0 0.0
          %518 = vmatpush1.msra.mxu0 0.0
          %519 = vmatprep.subr.mxu0 0.0
          %520 = vmatpush1.msra.mxu0 0.0
          %521 = vmatprep.subr.mxu0 0.0
          %522 = vmatpush1.msra.mxu0 0.0
          %523 = vmatprep.subr.mxu0 0.0
          %524 = vmatpush1.msra.mxu0 0.0
          %525 = vmatprep.mubr.f32.mxu0 0.0
          %526 = vmatmul.mubr.f32.gmra.mrb[0].mxu0 %v446
          %v527 = vpop.f32.mrb[0].mxu0
          %v528 = vadd.f32 0.0, %v527
          %v529 = vpop.f32.mrb[0].mxu0
          %530 = vmatprep.mubr.f32.mxu0 0.0
          %531 = vmatmul.mubr.f32.gmra.mrb[0].mxu0 %v449
          %v532 = vpop.f32.mrb[0].mxu0
          %v533 = vadd.f32 0.0, %v532
          %v534 = vpop.f32.mrb[0].mxu0
          %535 = vmatprep.mubr.f32.mxu0 0.0
          %536 = vmatmul.mubr.f32.gmra.mrb[0].mxu0 %v452
          %v537 = vpop.f32.mrb[0].mxu0
          %v538 = vadd.f32 0.0, %v537
          %v539 = vpop.f32.mrb[0].mxu0
          %540 = vmatprep.mubr.f32.mxu0 0.0
          %541 = vmatmul.mubr.f32.gmra.mrb[0].mxu0 %v455
          %v542 = vpop.f32.mrb[0].mxu0
          %v543 = vadd.f32 0.0, %v542
          %v544 = vpop.f32.mrb[0].mxu0
          %545 = vdwg.mxu0
          %v547 = vsel %vm457, %v372, 0
          %549 = vmatprep.subr.mxu0 0.0
          %550 = vmatpush1.msra.mxu0 %v547
          %551 = vmatprep.subr.mxu0 0.0
          %552 = vmatpush1.msra.mxu0 0.0
          %553 = vmatprep.subr.mxu0 0.0
          %554 = vmatpush1.msra.mxu0 0.0
          %555 = vmatprep.subr.mxu0 0.0
          %556 = vmatpush1.msra.mxu0 0.0
          %557 = vmatprep.subr.mxu0 0.0
          %558 = vmatpush1.msra.mxu0 0.0
          %559 = vmatprep.subr.mxu0 0.0
          %560 = vmatpush1.msra.mxu0 0.0
          %561 = vmatprep.subr.mxu0 0.0
          %562 = vmatpush1.msra.mxu0 0.0
          %563 = vmatprep.subr.mxu0 0.0
          %564 = vmatpush1.msra.mxu0 0.0
          %565 = vmatprep.subr.mxu0 0.0
          %566 = vmatpush1.msra.mxu0 0.0
          %567 = vmatprep.subr.mxu0 0.0
          %568 = vmatpush1.msra.mxu0 0.0
          %569 = vmatprep.subr.mxu0 0.0
          %570 = vmatpush1.msra.mxu0 0.0
          %571 = vmatprep.subr.mxu0 0.0
          %572 = vmatpush1.msra.mxu0 0.0
          %573 = vmatprep.subr.mxu0 0.0
          %574 = vmatpush1.msra.mxu0 0.0
          %575 = vmatprep.subr.mxu0 0.0
          %576 = vmatpush1.msra.mxu0 0.0
          %577 = vmatprep.subr.mxu0 0.0
          %578 = vmatpush1.msra.mxu0 0.0
          %579 = vmatprep.subr.mxu0 0.0
          %580 = vmatpush1.msra.mxu0 0.0
          %581 = vmatprep.subr.mxu0 0.0
          %582 = vmatpush1.msra.mxu0 0.0
          %583 = vmatprep.subr.mxu0 0.0
          %584 = vmatpush1.msra.mxu0 0.0
          %585 = vmatprep.subr.mxu0 0.0
          %586 = vmatpush1.msra.mxu0 0.0
          %587 = vmatprep.subr.mxu0 0.0
          %588 = vmatpush1.msra.mxu0 0.0
          %589 = vmatprep.subr.mxu0 0.0
          %590 = vmatpush1.msra.mxu0 0.0
          %591 = vmatprep.subr.mxu0 0.0
          %592 = vmatpush1.msra.mxu0 0.0
          %593 = vmatprep.subr.mxu0 0.0
          %594 = vmatpush1.msra.mxu0 0.0
          %595 = vmatprep.subr.mxu0 0.0
          %596 = vmatpush1.msra.mxu0 0.0
          %597 = vmatprep.subr.mxu0 0.0
          %598 = vmatpush1.msra.mxu0 0.0
          %599 = vmatprep.subr.mxu0 0.0
          %600 = vmatpush1.msra.mxu0 0.0
          %601 = vmatprep.subr.mxu0 0.0
          %602 = vmatpush1.msra.mxu0 0.0
          %603 = vmatprep.subr.mxu0 0.0
          %604 = vmatpush1.msra.mxu0 0.0
          %605 = vmatprep.subr.mxu0 0.0
          %606 = vmatpush1.msra.mxu0 0.0
          %607 = vmatprep.subr.mxu0 0.0
          %608 = vmatpush1.msra.mxu0 0.0
          %609 = vmatprep.subr.mxu0 0.0
          %610 = vmatpush1.msra.mxu0 0.0
          %611 = vmatprep.subr.mxu0 0.0
          %612 = vmatpush1.msra.mxu0 0.0
          %613 = vmatprep.mubr.f32.mxu0 0.0
          %614 = vmatmul.mubr.f32.gmra.mrb[0].mxu0 %v446
          %v615 = vpop.f32.mrb[0].mxu0
          %v616 = vadd.f32 %v528, %v615
          %v617 = vpop.f32.mrb[0].mxu0
          %618 = vmatprep.mubr.f32.mxu0 0.0
          %619 = vmatmul.mubr.f32.gmra.mrb[0].mxu0 %v449
          %v620 = vpop.f32.mrb[0].mxu0
          %v621 = vadd.f32 %v533, %v620
          %v622 = vpop.f32.mrb[0].mxu0
          %623 = vmatprep.mubr.f32.mxu0 0.0
          %624 = vmatmul.mubr.f32.gmra.mrb[0].mxu0 %v452
          %v625 = vpop.f32.mrb[0].mxu0
          %v626 = vadd.f32 %v538, %v625
          %v627 = vpop.f32.mrb[0].mxu0
          %628 = vmatprep.mubr.f32.mxu0 0.0
          %629 = vmatmul.mubr.f32.gmra.mrb[0].mxu0 %v455
          %v630 = vpop.f32.mrb[0].mxu0
          %v631 = vadd.f32 %v543, %v630
          %v632 = vpop.f32.mrb[0].mxu0
          %633 = vdwg.mxu0
          %v634 = vxor.u32 %v616, 2147483648
          %v635 = vxor.u32 %v621, 2147483648
          %v636 = vxor.u32 %v626, 2147483648
          %v637 = vxor.u32 %v631, 2147483648
          %v638 = vmul.f32 %v634, 1.442695
          %v639 = vpow.pop %v638
          %v640 = vmul.f32 %v635, 1.442695
          %v641 = vpow.pop %v640
          %v642 = vmul.f32 %v636, 1.442695
          %v643 = vpow.pop %v642
          %v644 = vmul.f32 %v637, 1.442695
          %v645 = vpow.pop %v644
          %v646 = vadd.f32 %v639, 1.0
          %v647 = vadd.f32 %v641, 1.0
          %v648 = vadd.f32 %v643, 1.0
          %v649 = vadd.f32 %v645, 1.0
          %v650 = vrcp.pop %v646
          %v651 = vmul.f32 1.0, %v650
          %v652 = vrcp.pop %v647
          %v653 = vmul.f32 1.0, %v652
          %v654 = vrcp.pop %v648
          %v655 = vmul.f32 1.0, %v654
          %v656 = vrcp.pop %v649
          %v657 = vmul.f32 1.0, %v656
          %658 = vst.msk [vmem:[%s207] sm:$0xff] %vm249, %v651
          %659 = vst.msk [vmem:[%s207 + $0x8] sm:$0xff] %vm249, %v653
          %660 = vst.msk [vmem:[%s207 + $0x10] sm:$0xff] %vm249, %v655
          %661 = vst.msk [vmem:[%s207 + $0x18] sm:$0xff] %vm249, %v657
        $region44: #{tpu_custom_call.1} parent=31 // pred_fallthru
          _
        %p662 = scmp.lt.s32.totalorder %s21, 1
        %s663 = scalar_select %p662, %s21, 1
        %s664 = smul.addr %s663, 4
        %s665 = smul.addr %s664, 8
        %s666 = scalar_lea.vmem %s3, %s665
        // Predicated region
        $region45: #{tpu_custom_call.1} parent=31 // pred_check
          %p667 = pneg %p117
        $region46: #{tpu_custom_call.1} parent=31 // pred_check_branch
          %669 = sbr.rel (%p667) target = $region48
        $region47: #{tpu_custom_call.1} parent=31 // pred_region
          _
        $region48: #{tpu_custom_call.1} parent=31 // pred_fallthru
          _
      $region32: #{tpu_custom_call.1} parent=5 // pred_fallthru
        _
      %p670 = scmp.le.s32.totalorder 2, %s12
      // Predicated region
      $region49: #{tpu_custom_call.1} parent=5 // pred_check
        %p671 = pneg %p670
      $region50: #{tpu_custom_call.1} parent=5 // pred_check_branch
        %673 = sbr.rel (%p671) target = $region52
      $region51: #{tpu_custom_call.1} parent=5 // pred_region
        %s674 = ssub.s32 %s12, 2
        // Predicated region
        $region53: #{tpu_custom_call.1} parent=51 // pred_check
          %p675 = pneg %p123
        $region54: #{tpu_custom_call.1} parent=51 // pred_check_branch
          %677 = sbr.rel (%p675) target = $region56
        $region55: #{tpu_custom_call.1} parent=51 // pred_region
          %p678 = scmp.lt.s32.totalorder %s23, 1
          %s679 = scalar_select %p678, %s23, 1
          %s680 = smul.addr %s679, 4
          %s681 = smul.addr %s680, 8
          %s682 = scalar_lea.vmem %s3, %s681
        $region56: #{tpu_custom_call.1} parent=51 // pred_fallthru
          _
      $region52: #{tpu_custom_call.1} parent=5 // pred_fallthru
        _
    $region6: #{tpu_custom_call.1} parent=1 // loop_footer
      %s16 = sadd.s32 1, %s12
    $region7: #{tpu_custom_call.1} parent=1 // loop_footer_branch
      %11 = sbr.rel target = $region3
    $region8: #{tpu_custom_call.1} parent=1 // loop_exit
      _
    %683 = vsyncpa [#allocation5], 1
    %s684 = scalar_lea.sflag [#allocation5], 1
    %685 = vsyncpa %s684, 1

</llo_original>
